<compile_context>
chip_gen: v5e
topology: v5e:2x2
jax: 0.10.0
libtpu: 0.0.40
codegen_flags: <defaults>
</compile_context>

<pallas_src>
import jax
import jax.numpy as jnp
from jax.experimental import pallas as pl
from jax.experimental.pallas import tpu as pltpu

LANE = 128      # vreg lane width (last dim)
SUBLANE = 8     # vreg sublane count (second-to-last dim)


def _round_up(n, m):
    return ((n + m - 1) // m) * m


def _pad2d(a, rows, cols):
    r, c = a.shape
    if r == rows and c == cols:
        return a                      # no-op when already aligned (no extra HBM traffic)
    return jnp.pad(a, ((0, rows - r), (0, cols - c)))


# ---------------------------------------------------------------------------
# Kernel: three MXU matmuls + VPU bias/ReLU, fully fused in VMEM, f32 accumulation.
# ---------------------------------------------------------------------------
def mlp_kernel(x_ref, w1_ref, b1_ref, w2_ref, b2_ref, w3_ref, b3_ref, o_ref):
    cdt = w1_ref.dtype  # MXU input dtype (f32 or bf16); accumulation is always f32

    h = jnp.dot(x_ref[...], w1_ref[...], preferred_element_type=jnp.float32) + b1_ref[...]
    h = jnp.maximum(h, 0.0).astype(cdt)

    h = jnp.dot(h, w2_ref[...], preferred_element_type=jnp.float32) + b2_ref[...]
    h = jnp.maximum(h, 0.0).astype(cdt)

    h = jnp.dot(h, w3_ref[...], preferred_element_type=jnp.float32) + b3_ref[...]
    o_ref[...] = h.astype(o_ref.dtype)


# ---------------------------------------------------------------------------
# One-time parameter preparation: pad to lane multiples (and optionally cast bf16).
# Call once and cache the result alongside the params; mlp_forward reuses it.
# ---------------------------------------------------------------------------
def prepare_params(params, *, use_bf16=False, lane_multiple=LANE):
    # lane_multiple: 128 everywhere; bump to 256 on v6e/v7x once MXU-bound (2x256x256 MXU).
    w1, b1, w2, b2, w3, b3 = params
    D_in, H1 = w1.shape
    H2 = w2.shape[1]
    D_out = w3.shape[1]

    Dp = _round_up(D_in, lane_multiple)
    H1p = _round_up(H1, lane_multiple)
    H2p = _round_up(H2, lane_multiple)
    Op = _round_up(D_out, lane_multiple)

    wdt = jnp.bfloat16 if use_bf16 else jnp.float32

    w1p = _pad2d(w1.astype(jnp.float32), Dp, H1p).astype(wdt)
    w2p = _pad2d(w2.astype(jnp.float32), H1p, H2p).astype(wdt)
    w3p = _pad2d(w3.astype(jnp.float32), H2p, Op).astype(wdt)
    # Biases stay f32 (added to the f32 MXU accumulator), stored lane-dense as (1, Np).
    b1p = _pad2d(jnp.reshape(b1, (1, -1)).astype(jnp.float32), 1, H1p)
    b2p = _pad2d(jnp.reshape(b2, (1, -1)).astype(jnp.float32), 1, H2p)
    b3p = _pad2d(jnp.reshape(b3, (1, -1)).astype(jnp.float32), 1, Op)

    return (w1p, b1p, w2p, b2p, w3p, b3p), (D_in, H1, H2, D_out)


# ---------------------------------------------------------------------------
# Forward pass.
# ---------------------------------------------------------------------------
def mlp_forward(
    x,
    prepared,
    *,
    max_batch_block=1024,
    vmem_budget_bytes=48 * 1024 * 1024,   # working-set target (weights + act blocks)
    vmem_limit_bytes=64 * 1024 * 1024,    # scoped VMEM limit: >v5e's 16MiB default, <=v7x physical
):
    (w1p, b1p, w2p, b2p, w3p, b3p), (D_in, H1, H2, D_out) = prepared

    # Padded dims come from the prepared weights (guarantees consistency with x padding).
    Dp, H1p = w1p.shape
    H2p = w2p.shape[1]
    Op = w3p.shape[1]

    B = x.shape[0]
    cdt = w1p.dtype                       # compute dtype for MXU inputs
    xbytes = jnp.dtype(cdt).itemsize
    wbytes = xbytes

    # --- derive batch tile TB from the VMEM budget --------------------------
    # Resident (single-buffered) weights + biases:
    weight_vmem = (Dp * H1p + H1p * H2p + H2p * Op) * wbytes + (H1p + H2p + Op) * 4
    # Streaming blocks: x/out double-buffered; f32 intermediates headroom per row.
    per_row = 2 * (Dp * xbytes + Op * 4) + (H1p + H2p) * 4
    avail = max(vmem_budget_bytes - weight_vmem, 0)
    tb_cap = avail // per_row if per_row > 0 else max_batch_block

    TB = min(int(max_batch_block), int(tb_cap), _round_up(B, SUBLANE))
    # Give the "parallel" batch axis >=2 blocks when the batch is big enough (v7x megacore).
    if B >= 2 * SUBLANE:
        TB = min(TB, _round_up((B + 1) // 2, SUBLANE))
    TB = max(SUBLANE, (TB // SUBLANE) * SUBLANE)   # always a multiple of 8 sublanes

    Bp = _round_up(B, TB)
    num_blocks = Bp // TB

    # --- pad / cast activations (no-op when already aligned) ----------------
    xp = _pad2d(x, Bp, Dp)
    if xp.dtype != cdt:
        xp = xp.astype(cdt)

    flops = 2 * B * (D_in * H1 + H1 * H2 + H2 * D_out)
    bytes_accessed = (
        Bp * Dp * xbytes
        + (Dp * H1p + H1p * H2p + H2p * Op) * wbytes
        + (H1p + H2p + Op) * 4
        + Bp * Op * 4
    )

    # Constant-index (resident) blocks: single-buffered to halve their VMEM footprint.
    resident = pl.Buffered(1)

    out_padded = pl.pallas_call(
        mlp_kernel,
        out_shape=jax.ShapeDtypeStruct((Bp, Op), jnp.float32),
        grid_spec=pltpu.PrefetchScalarGridSpec(
            num_scalar_prefetch=0,
            grid=(num_blocks,),
            in_specs=[
                # Activations stream over the batch grid axis (double-buffered).
                pl.BlockSpec((TB, Dp), lambda i: (i, 0)),
                # Weights / biases: constant index_map -> DMA'd once, held resident.
                pl.BlockSpec((Dp, H1p), lambda i: (0, 0), pipeline_mode=resident),
                pl.BlockSpec((1, H1p), lambda i: (0, 0), pipeline_mode=resident),
                pl.BlockSpec((H1p, H2p), lambda i: (0, 0), pipeline_mode=resident),
                pl.BlockSpec((1, H2p), lambda i: (0, 0), pipeline_mode=resident),
                pl.BlockSpec((H2p, Op), lambda i: (0, 0), pipeline_mode=resident),
                pl.BlockSpec((1, Op), lambda i: (0, 0), pipeline_mode=resident),
            ],
            out_specs=pl.BlockSpec((TB, Op), lambda i: (i, 0)),
        ),
        compiler_params=pltpu.CompilerParams(
            dimension_semantics=("parallel",),        # batch blocks are independent
            vmem_limit_bytes=int(vmem_limit_bytes),
        ),
        cost_estimate=pl.CostEstimate(
            flops=int(flops), transcendentals=0, bytes_accessed=int(bytes_accessed)
        ),
    )(xp, w1p, b1p, w2p, b2p, w3p, b3p)

    # Slice padding back off only when padding was actually added.
    if Bp != B or Op != D_out:
        return out_padded[:B, :D_out]
    return out_padded


# ---------------------------------------------------------------------------
# Init / reference (mirror nn.Linear's U(-1/sqrt(fan_in), 1/sqrt(fan_in)) init).
# ---------------------------------------------------------------------------
def init_params(key, input_size, hidden_sizes, output_size):
    assert len(hidden_sizes) == 2
    dims = [input_size, hidden_sizes[0], hidden_sizes[1], output_size]
    params = []
    keys = jax.random.split(key, 6)
    k_idx = 0
    for i in range(3):
        fan_in, fan_out = dims[i], dims[i + 1]
        bound = 1.0 / jnp.sqrt(jnp.float32(fan_in))
        w = jax.random.uniform(keys[k_idx], (fan_in, fan_out),
                               minval=-bound, maxval=bound, dtype=jnp.float32)
        k_idx += 1
        b = jax.random.uniform(keys[k_idx], (1, fan_out),
                               minval=-bound, maxval=bound, dtype=jnp.float32)
        k_idx += 1
        params.extend([w, b])
    return tuple(params)


def mlp_reference(x, params):
    w1, b1, w2, b2, w3, b3 = params
    h1 = jnp.maximum(x @ w1 + b1, 0.0)
    h2 = jnp.maximum(h1 @ w2 + b2, 0.0)
    return h2 @ w3 + b3


if __name__ == "__main__":
    key = jax.random.PRNGKey(0)
    k_x, k_p = jax.random.split(key)

    batch = 8
    input_size = 32
    hidden_sizes = [64, 32]
    output_size = 16

    x = jax.random.normal(k_x, (batch, input_size), dtype=jnp.float32)
    params = init_params(k_p, input_size, hidden_sizes, output_size)
    ref = mlp_reference(x, params)

    # f32 path (exact-parity default).
    prepared_f32 = prepare_params(params, use_bf16=False)
    out = jax.block_until_ready(mlp_forward(x, prepared_f32))
    assert out.shape == (batch, output_size)
    assert jnp.allclose(out, ref, atol=1e-5, rtol=1e-5), "f32 mismatch vs reference"

    # bf16 MXU path (weights cast once at prepare time, f32 accumulation).
    prepared_bf16 = prepare_params(params, use_bf16=True)
    out_bf16 = jax.block_until_ready(mlp_forward(x, prepared_bf16))
    assert out_bf16.shape == (batch, output_size)
    assert jnp.allclose(out_bf16, ref, atol=1e-1, rtol=1e-1), "bf16 mismatch vs reference"

    print("KERNEL_OK")
</pallas_src>

<mosaic_0001>
module attributes {stable_mosaic.version = 11 : i64} {
  func.func @mlp_kernel(%arg0: i32, %arg1: memref<8x128xf32, #tpu.memory_space<vmem>>, %arg2: memref<128x128xf32, #tpu.memory_space<vmem>>, %arg3: memref<1x128xf32, #tpu.memory_space<vmem>>, %arg4: memref<128x128xf32, #tpu.memory_space<vmem>>, %arg5: memref<1x128xf32, #tpu.memory_space<vmem>>, %arg6: memref<128x128xf32, #tpu.memory_space<vmem>>, %arg7: memref<1x128xf32, #tpu.memory_space<vmem>>, %arg8: memref<8x128xf32, #tpu.memory_space<vmem>>) attributes {dimension_semantics = [#tpu.dimension_semantics<parallel>], iteration_bounds = array<i64: 1>, scalar_prefetch = 0 : i64, scratch_operands = 0 : i64, tpu.core_type = #tpu.core_type<tc>, window_params = [{transform_indices = @transform_0, window_bounds = array<i64: 8, 128>}, {pipeline_mode = #tpu.pipeline_mode<synchronous>, transform_indices = @transform_1, window_bounds = array<i64: 128, 128>}, {pipeline_mode = #tpu.pipeline_mode<synchronous>, transform_indices = @transform_2, window_bounds = array<i64: 1, 128>}, {pipeline_mode = #tpu.pipeline_mode<synchronous>, transform_indices = @transform_3, window_bounds = array<i64: 128, 128>}, {pipeline_mode = #tpu.pipeline_mode<synchronous>, transform_indices = @transform_4, window_bounds = array<i64: 1, 128>}, {pipeline_mode = #tpu.pipeline_mode<synchronous>, transform_indices = @transform_5, window_bounds = array<i64: 128, 128>}, {pipeline_mode = #tpu.pipeline_mode<synchronous>, transform_indices = @transform_6, window_bounds = array<i64: 1, 128>}, {transform_indices = @transform_7, window_bounds = array<i64: 8, 128>}]} {
    %c0 = arith.constant 0 : index
    %c0_0 = arith.constant 0 : index
    %0 = vector.load %arg1[%c0, %c0_0] : memref<8x128xf32, #tpu.memory_space<vmem>>, vector<8x128xf32>
    %c0_1 = arith.constant 0 : index
    %c0_2 = arith.constant 0 : index
    %1 = vector.load %arg2[%c0_1, %c0_2] : memref<128x128xf32, #tpu.memory_space<vmem>>, vector<128x128xf32>
    %cst = arith.constant dense<0.000000e+00> : vector<8x128xf32>
    %2 = tpu.matmul %0, %1, %cst {dimension_numbers = #tpu.dot_dimension_numbers<[1], [0], [0], [1], [0, 0, 1, 1], [], []>} : vector<8x128xf32>, vector<128x128xf32>, vector<8x128xf32> -> vector<8x128xf32>
    %c0_3 = arith.constant 0 : index
    %c0_4 = arith.constant 0 : index
    %3 = vector.load %arg3[%c0_3, %c0_4] : memref<1x128xf32, #tpu.memory_space<vmem>>, vector<1x128xf32>
    %4 = vector.broadcast %3 : vector<1x128xf32> to vector<8x128xf32>
    %5 = arith.addf %2, %4 : vector<8x128xf32>
    %cst_5 = arith.constant 0.000000e+00 : f32
    %6 = vector.broadcast %cst_5 : f32 to vector<8x128xf32>
    %7 = arith.maximumf %5, %6 : vector<8x128xf32>
    %c0_6 = arith.constant 0 : index
    %c0_7 = arith.constant 0 : index
    %8 = vector.load %arg4[%c0_6, %c0_7] : memref<128x128xf32, #tpu.memory_space<vmem>>, vector<128x128xf32>
    %cst_8 = arith.constant dense<0.000000e+00> : vector<8x128xf32>
    %9 = tpu.matmul %7, %8, %cst_8 {dimension_numbers = #tpu.dot_dimension_numbers<[1], [0], [0], [1], [0, 0, 1, 1], [], []>} : vector<8x128xf32>, vector<128x128xf32>, vector<8x128xf32> -> vector<8x128xf32>
    %c0_9 = arith.constant 0 : index
    %c0_10 = arith.constant 0 : index
    %10 = vector.load %arg5[%c0_9, %c0_10] : memref<1x128xf32, #tpu.memory_space<vmem>>, vector<1x128xf32>
    %11 = vector.broadcast %10 : vector<1x128xf32> to vector<8x128xf32>
    %12 = arith.addf %9, %11 : vector<8x128xf32>
    %cst_11 = arith.constant 0.000000e+00 : f32
    %13 = vector.broadcast %cst_11 : f32 to vector<8x128xf32>
    %14 = arith.maximumf %12, %13 : vector<8x128xf32>
    %c0_12 = arith.constant 0 : index
    %c0_13 = arith.constant 0 : index
    %15 = vector.load %arg6[%c0_12, %c0_13] : memref<128x128xf32, #tpu.memory_space<vmem>>, vector<128x128xf32>
    %cst_14 = arith.constant dense<0.000000e+00> : vector<8x128xf32>
    %16 = tpu.matmul %14, %15, %cst_14 {dimension_numbers = #tpu.dot_dimension_numbers<[1], [0], [0], [1], [0, 0, 1, 1], [], []>} : vector<8x128xf32>, vector<128x128xf32>, vector<8x128xf32> -> vector<8x128xf32>
    %c0_15 = arith.constant 0 : index
    %c0_16 = arith.constant 0 : index
    %17 = vector.load %arg7[%c0_15, %c0_16] : memref<1x128xf32, #tpu.memory_space<vmem>>, vector<1x128xf32>
    %18 = vector.broadcast %17 : vector<1x128xf32> to vector<8x128xf32>
    %19 = arith.addf %16, %18 : vector<8x128xf32>
    %c0_17 = arith.constant 0 : index
    %c0_18 = arith.constant 0 : index
    %20 = vector.load %arg8[%c0_17, %c0_18] : memref<8x128xf32, #tpu.memory_space<vmem>>, vector<8x128xf32>
    tpu.vector_store %arg8[%c0_17, %c0_18], %19 {strides = array<i32>} : memref<8x128xf32, #tpu.memory_space<vmem>>, vector<8x128xf32>,
    return
  }
  func.func @transform_0(%arg0: i32) -> (i32, i32) {
    %c0_i32 = arith.constant 0 : i32
    %c0_i32_0 = arith.constant 0 : i32
    return %arg0, %c0_i32 : i32, i32
  }
  func.func @transform_1(%arg0: i32) -> (i32, i32) {
    %c0_i32 = arith.constant 0 : i32
    %c0_i32_0 = arith.constant 0 : i32
    %c0_i32_1 = arith.constant 0 : i32
    return %c0_i32, %c0_i32_0 : i32, i32
  }
  func.func @transform_2(%arg0: i32) -> (i32, i32) {
    %c0_i32 = arith.constant 0 : i32
    %c0_i32_0 = arith.constant 0 : i32
    %c0_i32_1 = arith.constant 0 : i32
    return %c0_i32, %c0_i32_0 : i32, i32
  }
  func.func @transform_3(%arg0: i32) -> (i32, i32) {
    %c0_i32 = arith.constant 0 : i32
    %c0_i32_0 = arith.constant 0 : i32
    %c0_i32_1 = arith.constant 0 : i32
    return %c0_i32, %c0_i32_0 : i32, i32
  }
  func.func @transform_4(%arg0: i32) -> (i32, i32) {
    %c0_i32 = arith.constant 0 : i32
    %c0_i32_0 = arith.constant 0 : i32
    %c0_i32_1 = arith.constant 0 : i32
    return %c0_i32, %c0_i32_0 : i32, i32
  }
  func.func @transform_5(%arg0: i32) -> (i32, i32) {
    %c0_i32 = arith.constant 0 : i32
    %c0_i32_0 = arith.constant 0 : i32
    %c0_i32_1 = arith.constant 0 : i32
    return %c0_i32, %c0_i32_0 : i32, i32
  }
  func.func @transform_6(%arg0: i32) -> (i32, i32) {
    %c0_i32 = arith.constant 0 : i32
    %c0_i32_0 = arith.constant 0 : i32
    %c0_i32_1 = arith.constant 0 : i32
    return %c0_i32, %c0_i32_0 : i32, i32
  }
  func.func @transform_7(%arg0: i32) -> (i32, i32) {
    %c0_i32 = arith.constant 0 : i32
    %c0_i32_0 = arith.constant 0 : i32
    return %arg0, %c0_i32 : i32, i32
  }
}

</mosaic_0001>

<llo_original>
// kernel: tpu_custom_call.1
$region0: #{tpu_custom_call.1}
  #allocation0 [shape = 'u32[]', space=smem, size = 0x4, offset = 0x4, fixed_abs, tag = 'smem constant byte address 0x4 - core index']
  #allocation1 [shape = 'u32[72,128]{1,0:T(1,128)}', space=vmem, size = 0x9000, scoped, tag = 'internal scratch']
  %s0 = inlined_call_operand.hbm [shape: f32[8,128], index: 0, kind: input, shape index: {}]
  %s1 = inlined_call_operand.hbm [shape: f32[128,128], index: 1, kind: input, shape index: {}]
  %s2 = inlined_call_operand.vmem [shape: f32[1,128], index: 2, kind: input, shape index: {}]
  %s3 = inlined_call_operand.hbm [shape: f32[128,128], index: 3, kind: input, shape index: {}]
  %s4 = inlined_call_operand.vmem [shape: f32[1,128], index: 4, kind: input, shape index: {}]
  %s5 = inlined_call_operand.hbm [shape: f32[128,128], index: 5, kind: input, shape index: {}]
  %s6 = inlined_call_operand.vmem [shape: f32[1,128], index: 6, kind: input, shape index: {}]
  %s7 = inlined_call_operand.hbm [shape: f32[8,128], index: 7, kind: output, shape index: {}]
  %s8 = sld [smem:[#allocation0]]
  $region54: #{tpu_custom_call.1} parent=0
    _
  %s10 = ssub.s32 1, %s8
  %s11 = scalar_select 0, %s10, %s8
  $region1: #{tpu_custom_call.1} parent=0
    #allocation2 [shape = 'u8[4096]{0}', space=vmem, size = 0x1000, scoped, tag = 'input window, operand 0, single buffered']
    #allocation3 [shape = 's32[1]{0}', space=sflag, size = 0x4, scoped, tag = 'scoped memory for tpu_custom_call.1']
    #allocation4 [shape = 's32[1]{0}', space=sflag, size = 0x4, scoped, tag = 'scoped memory for tpu_custom_call.1']
    #allocation5 [shape = 'u8[65536]{0}', space=vmem, size = 0x10000, scoped, tag = 'input window, operand 1, single buffered']
    #allocation6 [shape = 's32[1]{0}', space=sflag, size = 0x4, scoped, tag = 'scoped memory for tpu_custom_call.1']
    #allocation7 [shape = 'u8[65536]{0}', space=vmem, size = 0x10000, scoped, tag = 'input window, operand 3, single buffered']
    #allocation8 [shape = 'u8[65536]{0}', space=vmem, size = 0x10000, scoped, tag = 'input window, operand 5, single buffered']
    #allocation9 [shape = 's32[1]{0}', space=sflag, size = 0x4, scoped, tag = 'scoped memory for tpu_custom_call.1']
    #allocation10 [shape = 'u8[4096]{0}', space=vmem, size = 0x1000, scoped, tag = 'output window, operand 0, single buffered']
    %12 = vsyncpa [#allocation3], 0
    %13 = vsyncpa [#allocation6], 0
    %14 = vsyncpa [#allocation9], 0
    %15 = vsyncpa [#allocation4], 0
    // Predicated region
    $region2: #{tpu_custom_call.1} parent=1 // pred_check
      _
    $region3: #{tpu_custom_call.1} parent=1 // pred_check_branch
      %17 = sbr.rel (0) target = $region5
    $region4: #{tpu_custom_call.1} parent=1 // pred_region
      %19 = vsyncadd [#allocation3], 0
      %s21 = sshll.u32 %s0, 4
      %s22 = int_to_ptr.hbm [resolvable:$true] %s21
      %s23 = sshll.u32 [#allocation2], 4
      %s24 = int_to_ptr.vmem [resolvable:$true] %s23
      %26 = dma.hbm_to_vmem [thread:$0]  %s22, 128, %s24, [#allocation3]
    $region5: #{tpu_custom_call.1} parent=1 // pred_fallthru
      _
    // Predicated region
    $region6: #{tpu_custom_call.1} parent=1 // pred_check
      _
    $region7: #{tpu_custom_call.1} parent=1 // pred_check_branch
      %28 = sbr.rel (0) target = $region9
    $region8: #{tpu_custom_call.1} parent=1 // pred_region
      %30 = vsyncadd [#allocation6], 0
      %s31 = sshll.u32 %s1, 4
      %s32 = int_to_ptr.hbm [resolvable:$true] %s31
      %s33 = sshll.u32 [#allocation5], 4
      %s34 = int_to_ptr.vmem [resolvable:$true] %s33
      %39 = dma.hbm_to_vmem [thread:$0]  %s32, 2048, %s34, [#allocation6], 128, 128, 8
    $region9: #{tpu_custom_call.1} parent=1 // pred_fallthru
      _
    // Predicated region
    $region10: #{tpu_custom_call.1} parent=1 // pred_check
      _
    $region11: #{tpu_custom_call.1} parent=1 // pred_check_branch
      %41 = sbr.rel (0) target = $region13
    $region12: #{tpu_custom_call.1} parent=1 // pred_region
      _
    $region13: #{tpu_custom_call.1} parent=1 // pred_fallthru
      _
    // Predicated region
    $region14: #{tpu_custom_call.1} parent=1 // pred_check
      _
    $region15: #{tpu_custom_call.1} parent=1 // pred_check_branch
      %43 = sbr.rel (0) target = $region17
    $region16: #{tpu_custom_call.1} parent=1 // pred_region
      %45 = vsyncadd [#allocation6], 0
      %s46 = sshll.u32 %s3, 4
      %s47 = int_to_ptr.hbm [resolvable:$true] %s46
      %s48 = sshll.u32 [#allocation7], 4
      %s49 = int_to_ptr.vmem [resolvable:$true] %s48
      %54 = dma.hbm_to_vmem [thread:$0]  %s47, 2048, %s49, [#allocation6], 128, 128, 8
    $region17: #{tpu_custom_call.1} parent=1 // pred_fallthru
      _
    // Predicated region
    $region18: #{tpu_custom_call.1} parent=1 // pred_check
      _
    $region19: #{tpu_custom_call.1} parent=1 // pred_check_branch
      %56 = sbr.rel (0) target = $region21
    $region20: #{tpu_custom_call.1} parent=1 // pred_region
      _
    $region21: #{tpu_custom_call.1} parent=1 // pred_fallthru
      _
    // Predicated region
    $region22: #{tpu_custom_call.1} parent=1 // pred_check
      _
    $region23: #{tpu_custom_call.1} parent=1 // pred_check_branch
      %58 = sbr.rel (0) target = $region25
    $region24: #{tpu_custom_call.1} parent=1 // pred_region
      %60 = vsyncadd [#allocation9], 0
      %s61 = sshll.u32 %s5, 4
      %s62 = int_to_ptr.hbm [resolvable:$true] %s61
      %s63 = sshll.u32 [#allocation8], 4
      %s64 = int_to_ptr.vmem [resolvable:$true] %s63
      %69 = dma.hbm_to_vmem [thread:$0]  %s62, 2048, %s64, [#allocation9], 128, 128, 8
    $region25: #{tpu_custom_call.1} parent=1 // pred_fallthru
      _
    // Predicated region
    $region26: #{tpu_custom_call.1} parent=1 // pred_check
      _
    $region27: #{tpu_custom_call.1} parent=1 // pred_check_branch
      %71 = sbr.rel (0) target = $region29
    $region28: #{tpu_custom_call.1} parent=1 // pred_region
      _
    $region29: #{tpu_custom_call.1} parent=1 // pred_fallthru
      _
    // Predicated region
    $region30: #{tpu_custom_call.1} parent=1 // pred_check
      _
    $region31: #{tpu_custom_call.1} parent=1 // pred_check_branch
      %73 = sbr.rel (0) target = $region33
    $region32: #{tpu_custom_call.1} parent=1 // pred_region
      %75 = dma.done [#allocation3], 128
    $region33: #{tpu_custom_call.1} parent=1 // pred_fallthru
      _
    // Predicated region
    $region34: #{tpu_custom_call.1} parent=1 // pred_check
      _
    $region35: #{tpu_custom_call.1} parent=1 // pred_check_branch
      %77 = sbr.rel (0) target = $region37
    $region36: #{tpu_custom_call.1} parent=1 // pred_region
      %79 = dma.done [#allocation6], 2048
    $region37: #{tpu_custom_call.1} parent=1 // pred_fallthru
      _
    // Predicated region
    $region38: #{tpu_custom_call.1} parent=1 // pred_check
      _
    $region39: #{tpu_custom_call.1} parent=1 // pred_check_branch
      %81 = sbr.rel (0) target = $region41
    $region40: #{tpu_custom_call.1} parent=1 // pred_region
      %83 = dma.done [#allocation6], 2048
    $region41: #{tpu_custom_call.1} parent=1 // pred_fallthru
      _
    // Predicated region
    $region42: #{tpu_custom_call.1} parent=1 // pred_check
      _
    $region43: #{tpu_custom_call.1} parent=1 // pred_check_branch
      %85 = sbr.rel (0) target = $region45
    $region44: #{tpu_custom_call.1} parent=1 // pred_region
      %87 = dma.done [#allocation9], 2048
    $region45: #{tpu_custom_call.1} parent=1 // pred_fallthru
      _
    %v88 = vld [vmem:[#allocation2] sm:$0xff]
    %v89 = vld [vmem:[#allocation5] sm:$0xff]
    %v90 = vld [vmem:[#allocation5 + $0x8] sm:$0xff]
    %v91 = vld [vmem:[#allocation5 + $0x10] sm:$0xff]
    %v92 = vld [vmem:[#allocation5 + $0x18] sm:$0xff]
    %v93 = vld [vmem:[#allocation5 + $0x20] sm:$0xff]
    %v94 = vld [vmem:[#allocation5 + $0x28] sm:$0xff]
    %v95 = vld [vmem:[#allocation5 + $0x30] sm:$0xff]
    %v96 = vld [vmem:[#allocation5 + $0x38] sm:$0xff]
    %v97 = vld [vmem:[#allocation5 + $0x40] sm:$0xff]
    %v98 = vld [vmem:[#allocation5 + $0x48] sm:$0xff]
    %v99 = vld [vmem:[#allocation5 + $0x50] sm:$0xff]
    %v100 = vld [vmem:[#allocation5 + $0x58] sm:$0xff]
    %v101 = vld [vmem:[#allocation5 + $0x60] sm:$0xff]
    %v102 = vld [vmem:[#allocation5 + $0x68] sm:$0xff]
    %v103 = vld [vmem:[#allocation5 + $0x70] sm:$0xff]
    %v104 = vld [vmem:[#allocation5 + $0x78] sm:$0xff]
    %v105 = vld [vmem:[%s2] sm:$0x1]
    %v107 = vperm.slane %v105, 0
    %109 = vmatpush.msra.mxu0 %v104
    %110 = vmatpush.msra.mxu0 %v103
    %111 = vmatpush.msra.mxu0 %v102
    %112 = vmatpush.msra.mxu0 %v101
    %113 = vmatpush.msra.mxu0 %v100
    %114 = vmatpush.msra.mxu0 %v99
    %115 = vmatpush.msra.mxu0 %v98
    %116 = vmatpush.msra.mxu0 %v97
    %117 = vmatpush.msra.mxu0 %v96
    %118 = vmatpush.msra.mxu0 %v95
    %119 = vmatpush.msra.mxu0 %v94
    %120 = vmatpush.msra.mxu0 %v93
    %121 = vmatpush.msra.mxu0 %v92
    %122 = vmatpush.msra.mxu0 %v91
    %123 = vmatpush.msra.mxu0 %v90
    %124 = vmatpush.msra.mxu0 %v89
    %125 = vmatmul.f32.gmra.mxu0 %v88
    %v126 = vpop.f32.mrf.mxu0
    %v127 = vadd.f32 %v107, %v126
    %128 = vdwg.mxu0
    %v129 = vmax.f32 %v127, 0.0
    %v130 = vld [vmem:[#allocation7] sm:$0xff]
    %v131 = vld [vmem:[#allocation7 + $0x8] sm:$0xff]
    %v132 = vld [vmem:[#allocation7 + $0x10] sm:$0xff]
    %v133 = vld [vmem:[#allocation7 + $0x18] sm:$0xff]
    %v134 = vld [vmem:[#allocation7 + $0x20] sm:$0xff]
    %v135 = vld [vmem:[#allocation7 + $0x28] sm:$0xff]
    %v136 = vld [vmem:[#allocation7 + $0x30] sm:$0xff]
    %v137 = vld [vmem:[#allocation7 + $0x38] sm:$0xff]
    %v138 = vld [vmem:[#allocation7 + $0x40] sm:$0xff]
    %v139 = vld [vmem:[#allocation7 + $0x48] sm:$0xff]
    %v140 = vld [vmem:[#allocation7 + $0x50] sm:$0xff]
    %v141 = vld [vmem:[#allocation7 + $0x58] sm:$0xff]
    %v142 = vld [vmem:[#allocation7 + $0x60] sm:$0xff]
    %v143 = vld [vmem:[#allocation7 + $0x68] sm:$0xff]
    %v144 = vld [vmem:[#allocation7 + $0x70] sm:$0xff]
    %v145 = vld [vmem:[#allocation7 + $0x78] sm:$0xff]
    %v146 = vld [vmem:[%s4] sm:$0x1]
    %v148 = vperm.slane %v146, 0
    %150 = vmatpush.msra.mxu0 %v145
    %151 = vmatpush.msra.mxu0 %v144
    %152 = vmatpush.msra.mxu0 %v143
    %153 = vmatpush.msra.mxu0 %v142
    %154 = vmatpush.msra.mxu0 %v141
    %155 = vmatpush.msra.mxu0 %v140
    %156 = vmatpush.msra.mxu0 %v139
    %157 = vmatpush.msra.mxu0 %v138
    %158 = vmatpush.msra.mxu0 %v137
    %159 = vmatpush.msra.mxu0 %v136
    %160 = vmatpush.msra.mxu0 %v135
    %161 = vmatpush.msra.mxu0 %v134
    %162 = vmatpush.msra.mxu0 %v133
    %163 = vmatpush.msra.mxu0 %v132
    %164 = vmatpush.msra.mxu0 %v131
    %165 = vmatpush.msra.mxu0 %v130
    %166 = vmatmul.f32.gmra.mxu0 %v129
    %v167 = vpop.f32.mrf.mxu0
    %v168 = vadd.f32 %v148, %v167
    %169 = vdwg.mxu0
    %v170 = vmax.f32 %v168, 0.0
    %v171 = vld [vmem:[#allocation8] sm:$0xff]
    %v172 = vld [vmem:[#allocation8 + $0x8] sm:$0xff]
    %v173 = vld [vmem:[#allocation8 + $0x10] sm:$0xff]
    %v174 = vld [vmem:[#allocation8 + $0x18] sm:$0xff]
    %v175 = vld [vmem:[#allocation8 + $0x20] sm:$0xff]
    %v176 = vld [vmem:[#allocation8 + $0x28] sm:$0xff]
    %v177 = vld [vmem:[#allocation8 + $0x30] sm:$0xff]
    %v178 = vld [vmem:[#allocation8 + $0x38] sm:$0xff]
    %v179 = vld [vmem:[#allocation8 + $0x40] sm:$0xff]
    %v180 = vld [vmem:[#allocation8 + $0x48] sm:$0xff]
    %v181 = vld [vmem:[#allocation8 + $0x50] sm:$0xff]
    %v182 = vld [vmem:[#allocation8 + $0x58] sm:$0xff]
    %v183 = vld [vmem:[#allocation8 + $0x60] sm:$0xff]
    %v184 = vld [vmem:[#allocation8 + $0x68] sm:$0xff]
    %v185 = vld [vmem:[#allocation8 + $0x70] sm:$0xff]
    %v186 = vld [vmem:[#allocation8 + $0x78] sm:$0xff]
    %v187 = vld [vmem:[%s6] sm:$0x1]
    %v189 = vperm.slane %v187, 0
    %191 = vmatpush.msra.mxu0 %v186
    %192 = vmatpush.msra.mxu0 %v185
    %193 = vmatpush.msra.mxu0 %v184
    %194 = vmatpush.msra.mxu0 %v183
    %195 = vmatpush.msra.mxu0 %v182
    %196 = vmatpush.msra.mxu0 %v181
    %197 = vmatpush.msra.mxu0 %v180
    %198 = vmatpush.msra.mxu0 %v179
    %199 = vmatpush.msra.mxu0 %v178
    %200 = vmatpush.msra.mxu0 %v177
    %201 = vmatpush.msra.mxu0 %v176
    %202 = vmatpush.msra.mxu0 %v175
    %203 = vmatpush.msra.mxu0 %v174
    %204 = vmatpush.msra.mxu0 %v173
    %205 = vmatpush.msra.mxu0 %v172
    %206 = vmatpush.msra.mxu0 %v171
    %207 = vmatmul.f32.gmra.mxu0 %v170
    %v208 = vpop.f32.mrf.mxu0
    %v209 = vadd.f32 %v189, %v208
    %210 = vdwg.mxu0
    %211 = vst [vmem:[#allocation10] sm:$0xff] %v209
    // Predicated region
    $region46: #{tpu_custom_call.1} parent=1 // pred_check
      _
    $region47: #{tpu_custom_call.1} parent=1 // pred_check_branch
      %213 = sbr.rel (0) target = $region49
    $region48: #{tpu_custom_call.1} parent=1 // pred_region
      %215 = vsyncadd [#allocation4], 0
      %s217 = sshll.u32 [#allocation10], 4
      %s218 = int_to_ptr.vmem [resolvable:$true] %s217
      %s219 = sshll.u32 %s7, 4
      %s220 = int_to_ptr.hbm [resolvable:$true] %s219
      %222 = dma.vmem_to_hbm [thread:$0]  %s218, 128, %s220, [#allocation4]
    $region49: #{tpu_custom_call.1} parent=1 // pred_fallthru
      _
    // Predicated region
    $region50: #{tpu_custom_call.1} parent=1 // pred_check
      _
    $region51: #{tpu_custom_call.1} parent=1 // pred_check_branch
      %224 = sbr.rel (0) target = $region53
    $region52: #{tpu_custom_call.1} parent=1 // pred_region
      %226 = dma.done [#allocation4], 128
    $region53: #{tpu_custom_call.1} parent=1 // pred_fallthru
      _
    %227 = vsyncpa [#allocation3], 1
    %228 = vsyncpa [#allocation6], 1
    %229 = vsyncpa [#allocation9], 1
    %230 = vsyncpa [#allocation4], 1

</llo_original>
